<compile_context>
chip_gen: v5e
topology: v5e:2x2
jax: 0.10.0
libtpu: 0.0.40
codegen_flags: <defaults>
</compile_context>

<pallas_src>
import math
import functools

import jax
import jax.numpy as jnp
from jax.experimental import pallas as pl
from jax.experimental.pallas import tpu as pltpu

_LANE = 128


def _round_up(x, m):
    return (x + m - 1) // m * m


def _encoder_kernel(x_ref, w1_ref, b1_ref, w2_ref, b2_ref, w3_ref, b3_ref, o_ref):
    # Fused 3-layer MLP with ReLU after each layer (matches bootstraps_encoder.forward).
    # MXU matmuls run in the streaming dtype (bf16 by default) with f32 accumulation;
    # bias-add and ReLU stay in f32, activations are cast back down only for the next dot.
    cdt = w1_ref.dtype
    x = x_ref[...]
    h1 = jnp.dot(x, w1_ref[...], preferred_element_type=jnp.float32) + b1_ref[...]
    h1 = jnp.maximum(h1, 0.0)                                     # relu
    h2 = jnp.dot(h1.astype(cdt), w2_ref[...],
                 preferred_element_type=jnp.float32) + b2_ref[...]
    h2 = jnp.maximum(h2, 0.0)                                     # relu
    z = jnp.dot(h2.astype(cdt), w3_ref[...],
                preferred_element_type=jnp.float32) + b3_ref[...]
    z = jnp.maximum(z, 0.0)                                       # relu
    o_ref[...] = z.astype(o_ref.dtype)


def _xla_forward(w, params, compute_dtype):
    # Fallback for tiny batches where a Pallas launch costs more than the compute.
    cd = compute_dtype
    f32 = jnp.float32
    h = jnp.maximum(jnp.dot(w.astype(cd), params["w1"].astype(cd),
                            preferred_element_type=f32) + params["b1"], 0.0)
    h = jnp.maximum(jnp.dot(h.astype(cd), params["w2"].astype(cd),
                            preferred_element_type=f32) + params["b2"], 0.0)
    z = jnp.maximum(jnp.dot(h.astype(cd), params["w3"].astype(cd),
                            preferred_element_type=f32) + params["b3"], 0.0)
    return z


@functools.partial(jax.jit, static_argnames=("block_b", "compute_dtype"))
def bootstraps_encoder_forward(w, params, block_b=256, compute_dtype=jnp.bfloat16):
    """w: (B, in_size) float32. params: dict of (in,out) weights and (1,out) biases."""
    B, in_size = w.shape
    w1, b1 = params["w1"], params["b1"]
    w2, b2 = params["w2"], params["b2"]
    w3, b3 = params["w3"], params["b3"]
    h1, h2, latent_dim = w1.shape[1], w2.shape[1], w3.shape[1]

    if B < 64:
        # Kernel launch + single grid step would exceed the compute at this size.
        return _xla_forward(w, params, compute_dtype)

    # ---- lane-dense padding: pad every layer's output features up to a multiple of 128
    # so output stores are unmasked and MXU columns are filled. Zero-padded weight cols
    # and zero biases give relu(0)=0 in the padded lanes, which then hit zero-padded
    # rows of the next layer, so real outputs are bit-identical to the unpadded math.
    h1p = _round_up(h1, _LANE)
    h2p = _round_up(h2, _LANE)
    ldp = _round_up(latent_dim, _LANE)

    def pad2(a, rows, cols):
        return jnp.pad(a, ((0, rows - a.shape[0]), (0, cols - a.shape[1])))

    w1p = pad2(w1, in_size, h1p).astype(compute_dtype)
    w2p = pad2(w2, h1p, h2p).astype(compute_dtype)
    w3p = pad2(w3, h2p, ldp).astype(compute_dtype)
    b1p = pad2(b1, 1, h1p).astype(jnp.float32)
    b2p = pad2(b2, 1, h2p).astype(jnp.float32)
    b3p = pad2(b3, 1, ldp).astype(jnp.float32)

    # bf16 HBM->VMEM stream for the batch (kernel is bandwidth-bound; halves bytes moved).
    x = w.astype(compute_dtype)

    # ---- batch tile: large to amortize per-step overhead, multiple of 16 (bf16 sublane
    # packing) unless it covers the whole batch (full-dim block is always layout-legal).
    if B <= block_b:
        bb = B
    else:
        bb = max(16, (block_b // 16) * 16)
    grid = (pl.cdiv(B, bb),)

    # ---- scoped-VMEM budget: double-buffered x/out streams + resident weights +
    # f32 intermediates + headroom.  Capped at 64 MiB (v7x per-TC VMEM).
    itemsize = jnp.dtype(compute_dtype).itemsize
    act_bytes = 2 * (bb * in_size * itemsize + bb * ldp * 4)
    wgt_bytes = 2 * ((in_size * h1p + h1p * h2p + h2p * ldp) * itemsize
                     + (h1p + h2p + ldp) * 4)          # 2 buffers each (default pipeline)
    tmp_bytes = bb * (h1p + h2p) * 4
    needed = act_bytes + wgt_bytes + tmp_bytes + (4 << 20)
    vmem_limit = int(min(64 << 20, max(32 << 20, needed)))

    rep2d = lambda i: (0, 0)   # weights/biases: constant block index -> DMA'd once, resident

    out = pl.pallas_call(
        _encoder_kernel,
        out_shape=jax.ShapeDtypeStruct((B, ldp), jnp.float32),
        grid_spec=pltpu.PrefetchScalarGridSpec(
            num_scalar_prefetch=0,
            grid=grid,
            in_specs=[
                pl.BlockSpec((bb, in_size), lambda i: (i, 0)),   # x tile (batch-tiled)
                pl.BlockSpec(w1p.shape, rep2d),
                pl.BlockSpec(b1p.shape, rep2d),
                pl.BlockSpec(w2p.shape, rep2d),
                pl.BlockSpec(b2p.shape, rep2d),
                pl.BlockSpec(w3p.shape, rep2d),
                pl.BlockSpec(b3p.shape, rep2d),
            ],
            out_specs=pl.BlockSpec((bb, ldp), lambda i: (i, 0)),  # lane-dense (ldp % 128 == 0)
        ),
        compiler_params=pltpu.CompilerParams(
            dimension_semantics=("parallel",),   # batch axis sharded across v7x TCs
            vmem_limit_bytes=vmem_limit,
        ),
    )(x, w1p, b1p, w2p, b2p, w3p, b3p)
    return out[:, :latent_dim]


def init_params(key, in_size, latent_dim, dtype=jnp.float32):
    """Deterministic init mimicking nn.Linear defaults: U(-1/sqrt(fan_in), 1/sqrt(fan_in)).
    Weights stored as (in_features, out_features)."""
    h1 = math.ceil(in_size / 2)
    h2 = math.ceil(in_size / 4)
    dims = [(in_size, h1), (h1, h2), (h2, latent_dim)]
    params = {}
    keys = jax.random.split(key, 2 * len(dims))
    for idx, (fin, fout) in enumerate(dims):
        bound = 1.0 / math.sqrt(fin)
        kw, kb = keys[2 * idx], keys[2 * idx + 1]
        params[f"w{idx+1}"] = jax.random.uniform(
            kw, (fin, fout), dtype=dtype, minval=-bound, maxval=bound)
        params[f"b{idx+1}"] = jax.random.uniform(
            kb, (1, fout), dtype=dtype, minval=-bound, maxval=bound)
    return params


def reference_forward(w, params, compute_dtype=jnp.float32):
    """Pure-JAX reference using the same cast/accumulation scheme as the kernel."""
    return _xla_forward(w, params, compute_dtype)


if __name__ == "__main__":
    key = jax.random.PRNGKey(0)
    k_param, k_input = jax.random.split(key)

    batch = 256        # block_b=128 -> 2 grid steps (keeps both v7x TensorCores busy)
    in_size = 64
    latent_dim = 8

    params = init_params(k_param, in_size, latent_dim)
    w = jax.random.normal(k_input, (batch, in_size), dtype=jnp.float32)

    z = bootstraps_encoder_forward(w, params, block_b=128)
    z = jax.block_until_ready(z)

    z_ref = reference_forward(w, params, compute_dtype=jnp.bfloat16)
    assert z.shape == (batch, latent_dim)
    assert jnp.allclose(z, z_ref, atol=1e-2, rtol=1e-2), "mismatch vs reference"

    print("KERNEL_OK")
</pallas_src>

<mosaic_0001>
module attributes {stable_mosaic.version = 11 : i64} {
  func.func @_encoder_kernel(%arg0: i32, %arg1: memref<128x64xbf16, #tpu.memory_space<vmem>>, %arg2: memref<64x128xbf16, #tpu.memory_space<vmem>>, %arg3: memref<1x128xf32, #tpu.memory_space<vmem>>, %arg4: memref<128x128xbf16, #tpu.memory_space<vmem>>, %arg5: memref<1x128xf32, #tpu.memory_space<vmem>>, %arg6: memref<128x128xbf16, #tpu.memory_space<vmem>>, %arg7: memref<1x128xf32, #tpu.memory_space<vmem>>, %arg8: memref<128x128xf32, #tpu.memory_space<vmem>>) attributes {dimension_semantics = [#tpu.dimension_semantics<parallel>], iteration_bounds = array<i64: 2>, scalar_prefetch = 0 : i64, scratch_operands = 0 : i64, tpu.core_type = #tpu.core_type<tc>, window_params = [{transform_indices = @transform_0, window_bounds = array<i64: 128, 64>}, {pipeline_mode = #tpu.pipeline_mode<synchronous>, transform_indices = @transform_1, window_bounds = array<i64: 64, 128>}, {pipeline_mode = #tpu.pipeline_mode<synchronous>, transform_indices = @transform_2, window_bounds = array<i64: 1, 128>}, {pipeline_mode = #tpu.pipeline_mode<synchronous>, transform_indices = @transform_3, window_bounds = array<i64: 128, 128>}, {pipeline_mode = #tpu.pipeline_mode<synchronous>, transform_indices = @transform_4, window_bounds = array<i64: 1, 128>}, {pipeline_mode = #tpu.pipeline_mode<synchronous>, transform_indices = @transform_5, window_bounds = array<i64: 128, 128>}, {pipeline_mode = #tpu.pipeline_mode<synchronous>, transform_indices = @transform_6, window_bounds = array<i64: 1, 128>}, {transform_indices = @transform_7, window_bounds = array<i64: 128, 128>}]} {
    %c0 = arith.constant 0 : index
    %c0_0 = arith.constant 0 : index
    %0 = vector.load %arg1[%c0, %c0_0] : memref<128x64xbf16, #tpu.memory_space<vmem>>, vector<128x64xbf16>
    %c0_1 = arith.constant 0 : index
    %c0_2 = arith.constant 0 : index
    %1 = vector.load %arg2[%c0_1, %c0_2] : memref<64x128xbf16, #tpu.memory_space<vmem>>, vector<64x128xbf16>
    %cst = arith.constant dense<0.000000e+00> : vector<128x128xf32>
    %2 = tpu.matmul %0, %1, %cst {dimension_numbers = #tpu.dot_dimension_numbers<[1], [0], [0], [1], [0, 0, 1, 1], [], []>} : vector<128x64xbf16>, vector<64x128xbf16>, vector<128x128xf32> -> vector<128x128xf32>
    %c0_3 = arith.constant 0 : index
    %c0_4 = arith.constant 0 : index
    %3 = vector.load %arg3[%c0_3, %c0_4] : memref<1x128xf32, #tpu.memory_space<vmem>>, vector<1x128xf32>
    %4 = vector.broadcast %3 : vector<1x128xf32> to vector<128x128xf32>
    %5 = arith.addf %2, %4 : vector<128x128xf32>
    %cst_5 = arith.constant 0.000000e+00 : f32
    %6 = vector.broadcast %cst_5 : f32 to vector<128x128xf32>
    %7 = arith.maximumf %5, %6 : vector<128x128xf32>
    %8 = arith.truncf %7 : vector<128x128xf32> to vector<128x128xbf16>
    %c0_6 = arith.constant 0 : index
    %c0_7 = arith.constant 0 : index
    %9 = vector.load %arg4[%c0_6, %c0_7] : memref<128x128xbf16, #tpu.memory_space<vmem>>, vector<128x128xbf16>
    %cst_8 = arith.constant dense<0.000000e+00> : vector<128x128xf32>
    %10 = tpu.matmul %8, %9, %cst_8 {dimension_numbers = #tpu.dot_dimension_numbers<[1], [0], [0], [1], [0, 0, 1, 1], [], []>} : vector<128x128xbf16>, vector<128x128xbf16>, vector<128x128xf32> -> vector<128x128xf32>
    %c0_9 = arith.constant 0 : index
    %c0_10 = arith.constant 0 : index
    %11 = vector.load %arg5[%c0_9, %c0_10] : memref<1x128xf32, #tpu.memory_space<vmem>>, vector<1x128xf32>
    %12 = vector.broadcast %11 : vector<1x128xf32> to vector<128x128xf32>
    %13 = arith.addf %10, %12 : vector<128x128xf32>
    %cst_11 = arith.constant 0.000000e+00 : f32
    %14 = vector.broadcast %cst_11 : f32 to vector<128x128xf32>
    %15 = arith.maximumf %13, %14 : vector<128x128xf32>
    %16 = arith.truncf %15 : vector<128x128xf32> to vector<128x128xbf16>
    %c0_12 = arith.constant 0 : index
    %c0_13 = arith.constant 0 : index
    %17 = vector.load %arg6[%c0_12, %c0_13] : memref<128x128xbf16, #tpu.memory_space<vmem>>, vector<128x128xbf16>
    %cst_14 = arith.constant dense<0.000000e+00> : vector<128x128xf32>
    %18 = tpu.matmul %16, %17, %cst_14 {dimension_numbers = #tpu.dot_dimension_numbers<[1], [0], [0], [1], [0, 0, 1, 1], [], []>} : vector<128x128xbf16>, vector<128x128xbf16>, vector<128x128xf32> -> vector<128x128xf32>
    %c0_15 = arith.constant 0 : index
    %c0_16 = arith.constant 0 : index
    %19 = vector.load %arg7[%c0_15, %c0_16] : memref<1x128xf32, #tpu.memory_space<vmem>>, vector<1x128xf32>
    %20 = vector.broadcast %19 : vector<1x128xf32> to vector<128x128xf32>
    %21 = arith.addf %18, %20 : vector<128x128xf32>
    %cst_17 = arith.constant 0.000000e+00 : f32
    %22 = vector.broadcast %cst_17 : f32 to vector<128x128xf32>
    %23 = arith.maximumf %21, %22 : vector<128x128xf32>
    %c0_18 = arith.constant 0 : index
    %c0_19 = arith.constant 0 : index
    %24 = vector.load %arg8[%c0_18, %c0_19] : memref<128x128xf32, #tpu.memory_space<vmem>>, vector<128x128xf32>
    tpu.vector_store %arg8[%c0_18, %c0_19], %23 {strides = array<i32>} : memref<128x128xf32, #tpu.memory_space<vmem>>, vector<128x128xf32>,
    return
  }
  func.func @transform_0(%arg0: i32) -> (i32, i32) {
    %c0_i32 = arith.constant 0 : i32
    %c0_i32_0 = arith.constant 0 : i32
    return %arg0, %c0_i32 : i32, i32
  }
  func.func @transform_1(%arg0: i32) -> (i32, i32) {
    %c0_i32 = arith.constant 0 : i32
    %c0_i32_0 = arith.constant 0 : i32
    %c0_i32_1 = arith.constant 0 : i32
    return %c0_i32, %c0_i32_0 : i32, i32
  }
  func.func @transform_2(%arg0: i32) -> (i32, i32) {
    %c0_i32 = arith.constant 0 : i32
    %c0_i32_0 = arith.constant 0 : i32
    %c0_i32_1 = arith.constant 0 : i32
    return %c0_i32, %c0_i32_0 : i32, i32
  }
  func.func @transform_3(%arg0: i32) -> (i32, i32) {
    %c0_i32 = arith.constant 0 : i32
    %c0_i32_0 = arith.constant 0 : i32
    %c0_i32_1 = arith.constant 0 : i32
    return %c0_i32, %c0_i32_0 : i32, i32
  }
  func.func @transform_4(%arg0: i32) -> (i32, i32) {
    %c0_i32 = arith.constant 0 : i32
    %c0_i32_0 = arith.constant 0 : i32
    %c0_i32_1 = arith.constant 0 : i32
    return %c0_i32, %c0_i32_0 : i32, i32
  }
  func.func @transform_5(%arg0: i32) -> (i32, i32) {
    %c0_i32 = arith.constant 0 : i32
    %c0_i32_0 = arith.constant 0 : i32
    %c0_i32_1 = arith.constant 0 : i32
    return %c0_i32, %c0_i32_0 : i32, i32
  }
  func.func @transform_6(%arg0: i32) -> (i32, i32) {
    %c0_i32 = arith.constant 0 : i32
    %c0_i32_0 = arith.constant 0 : i32
    %c0_i32_1 = arith.constant 0 : i32
    return %c0_i32, %c0_i32_0 : i32, i32
  }
  func.func @transform_7(%arg0: i32) -> (i32, i32) {
    %c0_i32 = arith.constant 0 : i32
    %c0_i32_0 = arith.constant 0 : i32
    return %arg0, %c0_i32 : i32, i32
  }
}

</mosaic_0001>

<llo_original>
// kernel: bootstraps_encoder_forward.1
$region0: #{bootstraps_encoder_forward.1}
  #allocation0 [shape = 'u32[]', space=smem, size = 0x4, offset = 0x4, fixed_abs, tag = 'smem constant byte address 0x4 - core index']
  #allocation1 [shape = 'u32[72,128]{1,0:T(1,128)}', space=vmem, size = 0x9000, scoped, tag = 'internal scratch']
  %s0 = inlined_call_operand.vmem [shape: bf16[256,64], index: 0, kind: input, shape index: {}]
  %s1 = inlined_call_operand.vmem [shape: bf16[64,128], index: 1, kind: input, shape index: {}]
  %s2 = inlined_call_operand.vmem [shape: f32[1,128], index: 2, kind: input, shape index: {}]
  %s3 = inlined_call_operand.vmem [shape: bf16[128,128], index: 3, kind: input, shape index: {}]
  %s4 = inlined_call_operand.vmem [shape: f32[1,128], index: 4, kind: input, shape index: {}]
  %s5 = inlined_call_operand.vmem [shape: bf16[128,128], index: 5, kind: input, shape index: {}]
  %s6 = inlined_call_operand.vmem [shape: f32[1,128], index: 6, kind: input, shape index: {}]
  %s7 = inlined_call_operand.vmem [shape: f32[256,128], index: 7, kind: output, shape index: {}]
  %s8 = sld [smem:[#allocation0]]
  $region61: #{bootstraps_encoder_forward.1} parent=0
    _
  %s10 = ssub.s32 1, %s8
  %s11 = scalar_select 0, %s10, %s8
  loop: start=0, step=1, limit=4
  $region2: #{bootstraps_encoder_forward.1} parent=0 // loop_pre_header
    _
  $region3: #{bootstraps_encoder_forward.1} parent=0 // loop_header
    %s13 = sphi 0, %s17
    %p14 = scmp.ge.s32.totalorder %s13, 4
    %s23 = sphi 0, %s25
    %s26 = sphi 0, %s23
    %s27 = sphi 0, %s26
    %s43 = sphi 0, %s27
    %s47 = sphi 0, %s47
    %s49 = sphi 0, %s47
    %s50 = sphi 0, %s49
    %s64 = sphi 0, %s50
    %s68 = sphi 0, %s68
    %s70 = sphi 0, %s68
    %s71 = sphi 0, %s70
    %s85 = sphi 0, %s71
    %s89 = sphi 0, %s89
    %s91 = sphi 0, %s89
    %s92 = sphi 0, %s91
    %s106 = sphi 0, %s92
    %s110 = sphi 0, %s110
    %s112 = sphi 0, %s110
    %s113 = sphi 0, %s112
    %s127 = sphi 0, %s113
    %s131 = sphi 0, %s131
    %s133 = sphi 0, %s131
    %s134 = sphi 0, %s133
    %s148 = sphi 0, %s134
    %s152 = sphi 0, %s152
    %s154 = sphi 0, %s152
    %s155 = sphi 0, %s154
    %s169 = sphi 0, %s155
    %s175 = sphi 0, %s177
    %s178 = sphi 0, %s175
    %s179 = sphi 0, %s178
    %s195 = sphi 0, %s179
  $region4: #{bootstraps_encoder_forward.1} parent=0 // loop_header_branch
    %16 = sbr.rel (%p14) target = $region8
  $region5: #{bootstraps_encoder_forward.1} parent=0 // loop_body
    %s18 = ssub.s32 %s13, 1
    %s19 = ssub.s32 %s13, 2
    %s20 = sadd.s32 %s13, 1
    %s21 = ssub.s32 %s13, %s20
    %p22 = scmp.eq.s32.totalorder %s21, 0
    %s24 = sadd.s32 %s23, 1
    %s25 = scalar_select %p22, %s23, %s24
    %p28 = pneg %p22
    %p29 = scmp.eq.s32.totalorder %s13, 1
    %p30 = por %p28, %p29
    %p31 = scmp.ne.s32.totalorder %s23, %s26
    %p32 = scmp.eq.s32.totalorder %s13, 0
    %p33 = por %p31, %p32
    %p34 = scmp.ne.s32.totalorder %s23, %s26
    %p35 = scmp.eq.s32.totalorder %s18, 1
    %p36 = por %p34, %p35
    %p37 = scmp.ne.s32.totalorder %s26, %s27
    %p38 = scmp.eq.s32.totalorder %s18, 0
    %p39 = por %p37, %p38
    %p40 = scmp.ne.s32.totalorder %s26, %s27
    %p41 = scmp.eq.s32.totalorder %s19, 1
    %p42 = por %p40, %p41
    %p44 = scmp.ne.s32.totalorder %s27, %s43
    %p45 = scmp.eq.s32.totalorder %s19, 0
    %p46 = por %p44, %p45
    %s48 = sadd.s32 %s47, 1
    %p51 = scmp.eq.s32.totalorder %s13, 1
    %p52 = scmp.ne.s32.totalorder %s47, %s49
    %p53 = scmp.eq.s32.totalorder %s13, 0
    %p54 = por %p52, %p53
    %p55 = scmp.ne.s32.totalorder %s47, %s49
    %p56 = scmp.eq.s32.totalorder %s18, 1
    %p57 = por %p55, %p56
    %p58 = scmp.ne.s32.totalorder %s49, %s50
    %p59 = scmp.eq.s32.totalorder %s18, 0
    %p60 = por %p58, %p59
    %p61 = scmp.ne.s32.totalorder %s49, %s50
    %p62 = scmp.eq.s32.totalorder %s19, 1
    %p63 = por %p61, %p62
    %p65 = scmp.ne.s32.totalorder %s50, %s64
    %p66 = scmp.eq.s32.totalorder %s19, 0
    %p67 = por %p65, %p66
    %s69 = sadd.s32 %s68, 1
    %p72 = scmp.eq.s32.totalorder %s13, 1
    %p73 = scmp.ne.s32.totalorder %s68, %s70
    %p74 = scmp.eq.s32.totalorder %s13, 0
    %p75 = por %p73, %p74
    %p76 = scmp.ne.s32.totalorder %s68, %s70
    %p77 = scmp.eq.s32.totalorder %s18, 1
    %p78 = por %p76, %p77
    %p79 = scmp.ne.s32.totalorder %s70, %s71
    %p80 = scmp.eq.s32.totalorder %s18, 0
    %p81 = por %p79, %p80
    %p82 = scmp.ne.s32.totalorder %s70, %s71
    %p83 = scmp.eq.s32.totalorder %s19, 1
    %p84 = por %p82, %p83
    %p86 = scmp.ne.s32.totalorder %s71, %s85
    %p87 = scmp.eq.s32.totalorder %s19, 0
    %p88 = por %p86, %p87
    %s90 = sadd.s32 %s89, 1
    %p93 = scmp.eq.s32.totalorder %s13, 1
    %p94 = scmp.ne.s32.totalorder %s89, %s91
    %p95 = scmp.eq.s32.totalorder %s13, 0
    %p96 = por %p94, %p95
    %p97 = scmp.ne.s32.totalorder %s89, %s91
    %p98 = scmp.eq.s32.totalorder %s18, 1
    %p99 = por %p97, %p98
    %p100 = scmp.ne.s32.totalorder %s91, %s92
    %p101 = scmp.eq.s32.totalorder %s18, 0
    %p102 = por %p100, %p101
    %p103 = scmp.ne.s32.totalorder %s91, %s92
    %p104 = scmp.eq.s32.totalorder %s19, 1
    %p105 = por %p103, %p104
    %p107 = scmp.ne.s32.totalorder %s92, %s106
    %p108 = scmp.eq.s32.totalorder %s19, 0
    %p109 = por %p107, %p108
    %s111 = sadd.s32 %s110, 1
    %p114 = scmp.eq.s32.totalorder %s13, 1
    %p115 = scmp.ne.s32.totalorder %s110, %s112
    %p116 = scmp.eq.s32.totalorder %s13, 0
    %p117 = por %p115, %p116
    %p118 = scmp.ne.s32.totalorder %s110, %s112
    %p119 = scmp.eq.s32.totalorder %s18, 1
    %p120 = por %p118, %p119
    %p121 = scmp.ne.s32.totalorder %s112, %s113
    %p122 = scmp.eq.s32.totalorder %s18, 0
    %p123 = por %p121, %p122
    %p124 = scmp.ne.s32.totalorder %s112, %s113
    %p125 = scmp.eq.s32.totalorder %s19, 1
    %p126 = por %p124, %p125
    %p128 = scmp.ne.s32.totalorder %s113, %s127
    %p129 = scmp.eq.s32.totalorder %s19, 0
    %p130 = por %p128, %p129
    %s132 = sadd.s32 %s131, 1
    %p135 = scmp.eq.s32.totalorder %s13, 1
    %p136 = scmp.ne.s32.totalorder %s131, %s133
    %p137 = scmp.eq.s32.totalorder %s13, 0
    %p138 = por %p136, %p137
    %p139 = scmp.ne.s32.totalorder %s131, %s133
    %p140 = scmp.eq.s32.totalorder %s18, 1
    %p141 = por %p139, %p140
    %p142 = scmp.ne.s32.totalorder %s133, %s134
    %p143 = scmp.eq.s32.totalorder %s18, 0
    %p144 = por %p142, %p143
    %p145 = scmp.ne.s32.totalorder %s133, %s134
    %p146 = scmp.eq.s32.totalorder %s19, 1
    %p147 = por %p145, %p146
    %p149 = scmp.ne.s32.totalorder %s134, %s148
    %p150 = scmp.eq.s32.totalorder %s19, 0
    %p151 = por %p149, %p150
    %s153 = sadd.s32 %s152, 1
    %p156 = scmp.eq.s32.totalorder %s13, 1
    %p157 = scmp.ne.s32.totalorder %s152, %s154
    %p158 = scmp.eq.s32.totalorder %s13, 0
    %p159 = por %p157, %p158
    %p160 = scmp.ne.s32.totalorder %s152, %s154
    %p161 = scmp.eq.s32.totalorder %s18, 1
    %p162 = por %p160, %p161
    %p163 = scmp.ne.s32.totalorder %s154, %s155
    %p164 = scmp.eq.s32.totalorder %s18, 0
    %p165 = por %p163, %p164
    %p166 = scmp.ne.s32.totalorder %s154, %s155
    %p167 = scmp.eq.s32.totalorder %s19, 1
    %p168 = por %p166, %p167
    %p170 = scmp.ne.s32.totalorder %s155, %s169
    %p171 = scmp.eq.s32.totalorder %s19, 0
    %p172 = por %p170, %p171
    %s173 = ssub.s32 %s13, %s20
    %p174 = scmp.eq.s32.totalorder %s173, 0
    %s176 = sadd.s32 %s175, 1
    %s177 = scalar_select %p174, %s175, %s176
    %p180 = pneg %p174
    %p181 = scmp.eq.s32.totalorder %s13, 1
    %p182 = por %p180, %p181
    %p183 = scmp.ne.s32.totalorder %s175, %s178
    %p184 = scmp.eq.s32.totalorder %s13, 0
    %p185 = por %p183, %p184
    %p186 = scmp.ne.s32.totalorder %s175, %s178
    %p187 = scmp.eq.s32.totalorder %s18, 1
    %p188 = por %p186, %p187
    %p189 = scmp.ne.s32.totalorder %s178, %s179
    %p190 = scmp.eq.s32.totalorder %s18, 0
    %p191 = por %p189, %p190
    %p192 = scmp.ne.s32.totalorder %s178, %s179
    %p193 = scmp.eq.s32.totalorder %s19, 1
    %p194 = por %p192, %p193
    %p196 = scmp.ne.s32.totalorder %s179, %s195
    %p197 = scmp.eq.s32.totalorder %s19, 0
    %p198 = por %p196, %p197
    %p199 = scmp.le.s32.totalorder 1, %s13
    %p200 = scmp.lt.s32.totalorder %s13, 3
    %p201 = pnand %p199, %p200
    %p202 = pneg %p201
    // Predicated region
    $region9: #{bootstraps_encoder_forward.1} parent=5 // pred_check
      _
    $region10: #{bootstraps_encoder_forward.1} parent=5 // pred_check_branch
      %204 = sbr.rel (%p201) target = $region12
    $region11: #{bootstraps_encoder_forward.1} parent=5 // pred_region
      %s205 = ssub.s32 %s13, 1
      // Predicated region
      $region13: #{bootstraps_encoder_forward.1} parent=11 // pred_check
        %p206 = pneg %p60
      $region14: #{bootstraps_encoder_forward.1} parent=11 // pred_check_branch
        %208 = sbr.rel (%p206) target = $region16
      $region15: #{bootstraps_encoder_forward.1} parent=11 // pred_region
        _
      $region16: #{bootstraps_encoder_forward.1} parent=11 // pred_fallthru
        _
      // Predicated region
      $region17: #{bootstraps_encoder_forward.1} parent=11 // pred_check
        %p209 = pneg %p81
      $region18: #{bootstraps_encoder_forward.1} parent=11 // pred_check_branch
        %211 = sbr.rel (%p209) target = $region20
      $region19: #{bootstraps_encoder_forward.1} parent=11 // pred_region
        _
      $region20: #{bootstraps_encoder_forward.1} parent=11 // pred_fallthru
        _
      // Predicated region
      $region21: #{bootstraps_encoder_forward.1} parent=11 // pred_check
        %p212 = pneg %p102
      $region22: #{bootstraps_encoder_forward.1} parent=11 // pred_check_branch
        %214 = sbr.rel (%p212) target = $region24
      $region23: #{bootstraps_encoder_forward.1} parent=11 // pred_region
        _
      $region24: #{bootstraps_encoder_forward.1} parent=11 // pred_fallthru
        _
      // Predicated region
      $region25: #{bootstraps_encoder_forward.1} parent=11 // pred_check
        %p215 = pneg %p123
      $region26: #{bootstraps_encoder_forward.1} parent=11 // pred_check_branch
        %217 = sbr.rel (%p215) target = $region28
      $region27: #{bootstraps_encoder_forward.1} parent=11 // pred_region
        _
      $region28: #{bootstraps_encoder_forward.1} parent=11 // pred_fallthru
        _
      // Predicated region
      $region29: #{bootstraps_encoder_forward.1} parent=11 // pred_check
        %p218 = pneg %p144
      $region30: #{bootstraps_encoder_forward.1} parent=11 // pred_check_branch
        %220 = sbr.rel (%p218) target = $region32
      $region31: #{bootstraps_encoder_forward.1} parent=11 // pred_region
        _
      $region32: #{bootstraps_encoder_forward.1} parent=11 // pred_fallthru
        _
      // Predicated region
      $region33: #{bootstraps_encoder_forward.1} parent=11 // pred_check
        %p221 = pneg %p165
      $region34: #{bootstraps_encoder_forward.1} parent=11 // pred_check_branch
        %223 = sbr.rel (%p221) target = $region36
      $region35: #{bootstraps_encoder_forward.1} parent=11 // pred_region
        _
      $region36: #{bootstraps_encoder_forward.1} parent=11 // pred_fallthru
        _
    $region12: #{bootstraps_encoder_forward.1} parent=5 // pred_fallthru
      _
    %p224 = scmp.lt.s32.totalorder %s13, 2
    // Predicated region
    $region37: #{bootstraps_encoder_forward.1} parent=5 // pred_check
      %p225 = pneg %p224
    $region38: #{bootstraps_encoder_forward.1} parent=5 // pred_check_branch
      %227 = sbr.rel (%p225) target = $region40
    $region39: #{bootstraps_encoder_forward.1} parent=5 // pred_region
      // Predicated region
      $region41: #{bootstraps_encoder_forward.1} parent=39 // pred_check
        %p228 = pneg %p33
      $region42: #{bootstraps_encoder_forward.1} parent=39 // pred_check_branch
        %230 = sbr.rel (%p228) target = $region44
      $region43: #{bootstraps_encoder_forward.1} parent=39 // pred_region
        %s231 = smul.u32 16, %s13
        %p232 = scmp.lt.s32.totalorder %s231, 31
        %s233 = scalar_select %p232, %s231, 31
        %s234 = smul.addr %s233, 4
        %s235 = scalar_lea.vmem %s0, %s234
        %s236 = smul.u32 16, %s13
      $region44: #{bootstraps_encoder_forward.1} parent=39 // pred_fallthru
        _
    $region40: #{bootstraps_encoder_forward.1} parent=5 // pred_fallthru
      _
    %p237 = scmp.le.s32.totalorder 1, %s13
    %p238 = scmp.lt.s32.totalorder %s13, 3
    %p239 = pnand %p237, %p238
    %p240 = pneg %p239
    // Predicated region
    $region45: #{bootstraps_encoder_forward.1} parent=5 // pred_check
      _
    $region46: #{bootstraps_encoder_forward.1} parent=5 // pred_check_branch
      %242 = sbr.rel (%p239) target = $region48
    $region47: #{bootstraps_encoder_forward.1} parent=5 // pred_region
      %s243 = ssub.s32 %s13, 1
      %s244 = smul.u32 16, %s18
      %p245 = scmp.lt.s32.totalorder %s244, 31
      %s246 = scalar_select %p245, %s244, 31
      %s247 = smul.addr %s246, 4
      %s248 = scalar_lea.vmem %s0, %s247
      %p249 = pneg %p39
      %p250 = pneg %p36
      %p251 = pneg %p60
      %p252 = pneg %p57
      %p253 = pneg %p81
      %p254 = pneg %p78
      %p255 = pneg %p102
      %p256 = pneg %p99
      %p257 = pneg %p123
      %p258 = pneg %p120
      %p259 = pneg %p144
      %p260 = pneg %p141
      %p261 = pneg %p165
      %p262 = pneg %p162
      %p263 = pneg %p191
      %p264 = pneg %p188
      %s265 = smul.u32 16, %s18
      %p266 = scmp.lt.s32.totalorder %s265, 31
      %s267 = scalar_select %p266, %s265, 31
      %s268 = smul.addr %s267, 8
      %s269 = scalar_lea.vmem %s7, %s268
      %s270 = smul.u32 16, %s18
      %p271 = scmp.lt.s32.totalorder %s270, 31
      %s272 = scalar_select %p271, %s270, 31
      %s273 = smul.addr %s272, 4
      %s274 = scalar_lea.vmem %s0, %s273
      %s275 = smul.u32 16, %s18
      %s276 = smul.u32 16, %s18
      %p277 = scmp.lt.s32.totalorder %s276, 31
      %s278 = scalar_select %p277, %s276, 31
      %s279 = smul.addr %s278, 8
      %s280 = scalar_lea.vmem %s7, %s279
      %s281 = smul.u32 16, %s18
      %v283 = vld [vmem:[%s274] sm:$0xf]
      %v284 = vld [vmem:[%s274 + $0x4] sm:$0xf]
      %v285 = vld [vmem:[%s274 + $0x8] sm:$0xf]
      %v286 = vld [vmem:[%s274 + $0xc] sm:$0xf]
      %v287 = vld [vmem:[%s274 + $0x10] sm:$0xf]
      %v288 = vld [vmem:[%s274 + $0x14] sm:$0xf]
      %v289 = vld [vmem:[%s274 + $0x18] sm:$0xf]
      %v290 = vld [vmem:[%s274 + $0x1c] sm:$0xf]
      %v291 = vld [vmem:[%s274 + $0x20] sm:$0xf]
      %v292 = vld [vmem:[%s274 + $0x24] sm:$0xf]
      %v293 = vld [vmem:[%s274 + $0x28] sm:$0xf]
      %v294 = vld [vmem:[%s274 + $0x2c] sm:$0xf]
      %v295 = vld [vmem:[%s274 + $0x30] sm:$0xf]
      %v296 = vld [vmem:[%s274 + $0x34] sm:$0xf]
      %v297 = vld [vmem:[%s274 + $0x38] sm:$0xf]
      %v298 = vld [vmem:[%s274 + $0x3c] sm:$0xf]
      %v299 = vld [vmem:[%s1] sm:$0xf]
      %v300 = vld [vmem:[%s1 + $0x4] sm:$0xf]
      %v301 = vld [vmem:[%s1 + $0x8] sm:$0xf]
      %v302 = vld [vmem:[%s1 + $0xc] sm:$0xf]
      %v303 = vld [vmem:[%s1 + $0x10] sm:$0xf]
      %v304 = vld [vmem:[%s1 + $0x14] sm:$0xf]
      %v305 = vld [vmem:[%s1 + $0x18] sm:$0xf]
      %v306 = vld [vmem:[%s1 + $0x1c] sm:$0xf]
      %v307 = vld [vmem:[%s2] sm:$0x1]
      %v309 = vperm.slane %v307, 0
      %v327 = vunpack.c.l.b16 %v283
      %v328 = vunpack.c.l.b16 %v284
      %v329 = vunpack.c.l.b16 %v285
      %v330 = vunpack.c.l.b16 %v286
      %v331 = vunpack.c.l.b16 %v287
      %v332 = vunpack.c.l.b16 %v288
      %v333 = vunpack.c.l.b16 %v289
      %v334 = vunpack.c.l.b16 %v290
      %v335 = vunpack.c.l.b16 %v291
      %v336 = vunpack.c.l.b16 %v292
      %v337 = vunpack.c.l.b16 %v293
      %v338 = vunpack.c.l.b16 %v294
      %v339 = vunpack.c.l.b16 %v295
      %v340 = vunpack.c.l.b16 %v296
      %v341 = vunpack.c.l.b16 %v297
      %v342 = vunpack.c.l.b16 %v298
      %v343 = vpack.c.b16 %v328, %v327
      %v344 = vpack.c.b16 %v330, %v329
      %v345 = vpack.c.b16 %v332, %v331
      %v346 = vpack.c.b16 %v334, %v333
      %v347 = vpack.c.b16 %v336, %v335
      %v348 = vpack.c.b16 %v338, %v337
      %v349 = vpack.c.b16 %v340, %v339
      %v350 = vpack.c.b16 %v342, %v341
      %v359 = vunpack.c.l.b16 %v299
      %v360 = vunpack.c.l.b16 %v300
      %v361 = vunpack.c.l.b16 %v301
      %v362 = vunpack.c.l.b16 %v302
      %v363 = vunpack.c.l.b16 %v303
      %v364 = vunpack.c.l.b16 %v304
      %v365 = vunpack.c.l.b16 %v305
      %v366 = vunpack.c.l.b16 %v306
      %v367 = vpack.c.b16 %v360, %v359
      %v368 = vpack.c.b16 %v362, %v361
      %v369 = vpack.c.b16 %v364, %v363
      %v370 = vpack.c.b16 %v366, %v365
      %vm375 = vcmask 523264
      %v377 = vsel %vm375, %v343, 0
      %v380 = vsel %vm375, %v344, 0
      %v383 = vsel %vm375, %v345, 0
      %v386 = vsel %vm375, %v346, 0
      %v389 = vsel %vm375, %v347, 0
      %v392 = vsel %vm375, %v348, 0
      %v395 = vsel %vm375, %v349, 0
      %v398 = vsel %vm375, %v350, 0
      %400 = vmatpush.bf16.msra.mxu0 0
      %401 = vmatpush.bf16.msra.mxu0 0
      %402 = vmatpush.bf16.msra.mxu0 0
      %403 = vmatpush.bf16.msra.mxu0 0
      %404 = vmatpush.bf16.msra.mxu0 %v370
      %405 = vmatpush.bf16.msra.mxu0 %v369
      %406 = vmatpush.bf16.msra.mxu0 %v368
      %407 = vmatpush.bf16.msra.mxu0 %v367
      %408 = vmatmul.bf16.gmra.mxu0 %v377
      %v409 = vpop.f32.mrf.mxu0
      %v410 = vadd.f32 %v309, %v409
      %v411 = vpop.f32.mrf.mxu0
      %v412 = vadd.f32 %v309, %v411
      %413 = vmatmul.bf16.gmra.mxu0 %v380
      %v414 = vpop.f32.mrf.mxu0
      %v415 = vadd.f32 %v309, %v414
      %v416 = vpop.f32.mrf.mxu0
      %v417 = vadd.f32 %v309, %v416
      %418 = vmatmul.bf16.gmra.mxu0 %v383
      %v419 = vpop.f32.mrf.mxu0
      %v420 = vadd.f32 %v309, %v419
      %v421 = vpop.f32.mrf.mxu0
      %v422 = vadd.f32 %v309, %v421
      %423 = vmatmul.bf16.gmra.mxu0 %v386
      %v424 = vpop.f32.mrf.mxu0
      %v425 = vadd.f32 %v309, %v424
      %v426 = vpop.f32.mrf.mxu0
      %v427 = vadd.f32 %v309, %v426
      %428 = vmatmul.bf16.gmra.mxu0 %v389
      %v429 = vpop.f32.mrf.mxu0
      %v430 = vadd.f32 %v309, %v429
      %v431 = vpop.f32.mrf.mxu0
      %v432 = vadd.f32 %v309, %v431
      %433 = vmatmul.bf16.gmra.mxu0 %v392
      %v434 = vpop.f32.mrf.mxu0
      %v435 = vadd.f32 %v309, %v434
      %v436 = vpop.f32.mrf.mxu0
      %v437 = vadd.f32 %v309, %v436
      %438 = vmatmul.bf16.gmra.mxu0 %v395
      %v439 = vpop.f32.mrf.mxu0
      %v440 = vadd.f32 %v309, %v439
      %v441 = vpop.f32.mrf.mxu0
      %v442 = vadd.f32 %v309, %v441
      %443 = vmatmul.bf16.gmra.mxu0 %v398
      %v444 = vpop.f32.mrf.mxu0
      %v445 = vadd.f32 %v309, %v444
      %v446 = vpop.f32.mrf.mxu0
      %v447 = vadd.f32 %v309, %v446
      %448 = vdwg.mxu0
      %v449 = vmax.f32 %v410, 0.0
      %v450 = vmax.f32 %v412, 0.0
      %v451 = vmax.f32 %v415, 0.0
      %v452 = vmax.f32 %v417, 0.0
      %v453 = vmax.f32 %v420, 0.0
      %v454 = vmax.f32 %v422, 0.0
      %v455 = vmax.f32 %v425, 0.0
      %v456 = vmax.f32 %v427, 0.0
      %v457 = vmax.f32 %v430, 0.0
      %v458 = vmax.f32 %v432, 0.0
      %v459 = vmax.f32 %v435, 0.0
      %v460 = vmax.f32 %v437, 0.0
      %v461 = vmax.f32 %v440, 0.0
      %v462 = vmax.f32 %v442, 0.0
      %v463 = vmax.f32 %v445, 0.0
      %v464 = vmax.f32 %v447, 0.0
      %v465 = vpack.c.bf16 %v450, %v449
      %v466 = vpack.c.bf16 %v452, %v451
      %v467 = vpack.c.bf16 %v454, %v453
      %v468 = vpack.c.bf16 %v456, %v455
      %v469 = vpack.c.bf16 %v458, %v457
      %v470 = vpack.c.bf16 %v460, %v459
      %v471 = vpack.c.bf16 %v462, %v461
      %v472 = vpack.c.bf16 %v464, %v463
      %v473 = vld [vmem:[%s3] sm:$0xf]
      %v474 = vld [vmem:[%s3 + $0x4] sm:$0xf]
      %v475 = vld [vmem:[%s3 + $0x8] sm:$0xf]
      %v476 = vld [vmem:[%s3 + $0xc] sm:$0xf]
      %v477 = vld [vmem:[%s3 + $0x10] sm:$0xf]
      %v478 = vld [vmem:[%s3 + $0x14] sm:$0xf]
      %v479 = vld [vmem:[%s3 + $0x18] sm:$0xf]
      %v480 = vld [vmem:[%s3 + $0x1c] sm:$0xf]
      %v481 = vld [vmem:[%s3 + $0x20] sm:$0xf]
      %v482 = vld [vmem:[%s3 + $0x24] sm:$0xf]
      %v483 = vld [vmem:[%s3 + $0x28] sm:$0xf]
      %v484 = vld [vmem:[%s3 + $0x2c] sm:$0xf]
      %v485 = vld [vmem:[%s3 + $0x30] sm:$0xf]
      %v486 = vld [vmem:[%s3 + $0x34] sm:$0xf]
      %v487 = vld [vmem:[%s3 + $0x38] sm:$0xf]
      %v488 = vld [vmem:[%s3 + $0x3c] sm:$0xf]
      %v489 = vld [vmem:[%s4] sm:$0x1]
      %v491 = vperm.slane %v489, 0
      %v509 = vunpack.c.l.b16 %v473
      %v510 = vunpack.c.l.b16 %v474
      %v511 = vunpack.c.l.b16 %v475
      %v512 = vunpack.c.l.b16 %v476
      %v513 = vunpack.c.l.b16 %v477
      %v514 = vunpack.c.l.b16 %v478
      %v515 = vunpack.c.l.b16 %v479
      %v516 = vunpack.c.l.b16 %v480
      %v517 = vunpack.c.l.b16 %v481
      %v518 = vunpack.c.l.b16 %v482
      %v519 = vunpack.c.l.b16 %v483
      %v520 = vunpack.c.l.b16 %v484
      %v521 = vunpack.c.l.b16 %v485
      %v522 = vunpack.c.l.b16 %v486
      %v523 = vunpack.c.l.b16 %v487
      %v524 = vunpack.c.l.b16 %v488
      %v525 = vpack.c.b16 %v510, %v509
      %v526 = vpack.c.b16 %v512, %v511
      %v527 = vpack.c.b16 %v514, %v513
      %v528 = vpack.c.b16 %v516, %v515
      %v529 = vpack.c.b16 %v518, %v517
      %v530 = vpack.c.b16 %v520, %v519
      %v531 = vpack.c.b16 %v522, %v521
      %v532 = vpack.c.b16 %v524, %v523
      %541 = vmatpush.bf16.msra.mxu0 %v532
      %542 = vmatpush.bf16.msra.mxu0 %v531
      %543 = vmatpush.bf16.msra.mxu0 %v530
      %544 = vmatpush.bf16.msra.mxu0 %v529
      %545 = vmatpush.bf16.msra.mxu0 %v528
      %546 = vmatpush.bf16.msra.mxu0 %v527
      %547 = vmatpush.bf16.msra.mxu0 %v526
      %548 = vmatpush.bf16.msra.mxu0 %v525
      %549 = vmatmul.bf16.gmra.mxu0 %v465
      %v550 = vpop.f32.mrf.mxu0
      %v551 = vadd.f32 %v491, %v550
      %v552 = vpop.f32.mrf.mxu0
      %v553 = vadd.f32 %v491, %v552
      %554 = vmatmul.bf16.gmra.mxu0 %v466
      %v555 = vpop.f32.mrf.mxu0
      %v556 = vadd.f32 %v491, %v555
      %v557 = vpop.f32.mrf.mxu0
      %v558 = vadd.f32 %v491, %v557
      %559 = vmatmul.bf16.gmra.mxu0 %v467
      %v560 = vpop.f32.mrf.mxu0
      %v561 = vadd.f32 %v491, %v560
      %v562 = vpop.f32.mrf.mxu0
      %v563 = vadd.f32 %v491, %v562
      %564 = vmatmul.bf16.gmra.mxu0 %v468
      %v565 = vpop.f32.mrf.mxu0
      %v566 = vadd.f32 %v491, %v565
      %v567 = vpop.f32.mrf.mxu0
      %v568 = vadd.f32 %v491, %v567
      %569 = vmatmul.bf16.gmra.mxu0 %v469
      %v570 = vpop.f32.mrf.mxu0
      %v571 = vadd.f32 %v491, %v570
      %v572 = vpop.f32.mrf.mxu0
      %v573 = vadd.f32 %v491, %v572
      %574 = vmatmul.bf16.gmra.mxu0 %v470
      %v575 = vpop.f32.mrf.mxu0
      %v576 = vadd.f32 %v491, %v575
      %v577 = vpop.f32.mrf.mxu0
      %v578 = vadd.f32 %v491, %v577
      %579 = vmatmul.bf16.gmra.mxu0 %v471
      %v580 = vpop.f32.mrf.mxu0
      %v581 = vadd.f32 %v491, %v580
      %v582 = vpop.f32.mrf.mxu0
      %v583 = vadd.f32 %v491, %v582
      %584 = vmatmul.bf16.gmra.mxu0 %v472
      %v585 = vpop.f32.mrf.mxu0
      %v586 = vadd.f32 %v491, %v585
      %v587 = vpop.f32.mrf.mxu0
      %v588 = vadd.f32 %v491, %v587
      %589 = vdwg.mxu0
      %v590 = vmax.f32 %v551, 0.0
      %v591 = vmax.f32 %v553, 0.0
      %v592 = vmax.f32 %v556, 0.0
      %v593 = vmax.f32 %v558, 0.0
      %v594 = vmax.f32 %v561, 0.0
      %v595 = vmax.f32 %v563, 0.0
      %v596 = vmax.f32 %v566, 0.0
      %v597 = vmax.f32 %v568, 0.0
      %v598 = vmax.f32 %v571, 0.0
      %v599 = vmax.f32 %v573, 0.0
      %v600 = vmax.f32 %v576, 0.0
      %v601 = vmax.f32 %v578, 0.0
      %v602 = vmax.f32 %v581, 0.0
      %v603 = vmax.f32 %v583, 0.0
      %v604 = vmax.f32 %v586, 0.0
      %v605 = vmax.f32 %v588, 0.0
      %v606 = vpack.c.bf16 %v591, %v590
      %v607 = vpack.c.bf16 %v593, %v592
      %v608 = vpack.c.bf16 %v595, %v594
      %v609 = vpack.c.bf16 %v597, %v596
      %v610 = vpack.c.bf16 %v599, %v598
      %v611 = vpack.c.bf16 %v601, %v600
      %v612 = vpack.c.bf16 %v603, %v602
      %v613 = vpack.c.bf16 %v605, %v604
      %v614 = vld [vmem:[%s5] sm:$0xf]
      %v615 = vld [vmem:[%s5 + $0x4] sm:$0xf]
      %v616 = vld [vmem:[%s5 + $0x8] sm:$0xf]
      %v617 = vld [vmem:[%s5 + $0xc] sm:$0xf]
      %v618 = vld [vmem:[%s5 + $0x10] sm:$0xf]
      %v619 = vld [vmem:[%s5 + $0x14] sm:$0xf]
      %v620 = vld [vmem:[%s5 + $0x18] sm:$0xf]
      %v621 = vld [vmem:[%s5 + $0x1c] sm:$0xf]
      %v622 = vld [vmem:[%s5 + $0x20] sm:$0xf]
      %v623 = vld [vmem:[%s5 + $0x24] sm:$0xf]
      %v624 = vld [vmem:[%s5 + $0x28] sm:$0xf]
      %v625 = vld [vmem:[%s5 + $0x2c] sm:$0xf]
      %v626 = vld [vmem:[%s5 + $0x30] sm:$0xf]
      %v627 = vld [vmem:[%s5 + $0x34] sm:$0xf]
      %v628 = vld [vmem:[%s5 + $0x38] sm:$0xf]
      %v629 = vld [vmem:[%s5 + $0x3c] sm:$0xf]
      %v630 = vld [vmem:[%s6] sm:$0x1]
      %v632 = vperm.slane %v630, 0
      %v650 = vunpack.c.l.b16 %v614
      %v651 = vunpack.c.l.b16 %v615
      %v652 = vunpack.c.l.b16 %v616
      %v653 = vunpack.c.l.b16 %v617
      %v654 = vunpack.c.l.b16 %v618
      %v655 = vunpack.c.l.b16 %v619
      %v656 = vunpack.c.l.b16 %v620
      %v657 = vunpack.c.l.b16 %v621
      %v658 = vunpack.c.l.b16 %v622
      %v659 = vunpack.c.l.b16 %v623
      %v660 = vunpack.c.l.b16 %v624
      %v661 = vunpack.c.l.b16 %v625
      %v662 = vunpack.c.l.b16 %v626
      %v663 = vunpack.c.l.b16 %v627
      %v664 = vunpack.c.l.b16 %v628
      %v665 = vunpack.c.l.b16 %v629
      %v666 = vpack.c.b16 %v651, %v650
      %v667 = vpack.c.b16 %v653, %v652
      %v668 = vpack.c.b16 %v655, %v654
      %v669 = vpack.c.b16 %v657, %v656
      %v670 = vpack.c.b16 %v659, %v658
      %v671 = vpack.c.b16 %v661, %v660
      %v672 = vpack.c.b16 %v663, %v662
      %v673 = vpack.c.b16 %v665, %v664
      %682 = vmatpush.bf16.msra.mxu0 %v673
      %683 = vmatpush.bf16.msra.mxu0 %v672
      %684 = vmatpush.bf16.msra.mxu0 %v671
      %685 = vmatpush.bf16.msra.mxu0 %v670
      %686 = vmatpush.bf16.msra.mxu0 %v669
      %687 = vmatpush.bf16.msra.mxu0 %v668
      %688 = vmatpush.bf16.msra.mxu0 %v667
      %689 = vmatpush.bf16.msra.mxu0 %v666
      %690 = vmatmul.bf16.gmra.mxu0 %v606
      %v691 = vpop.f32.mrf.mxu0
      %v692 = vadd.f32 %v632, %v691
      %v693 = vpop.f32.mrf.mxu0
      %v694 = vadd.f32 %v632, %v693
      %695 = vmatmul.bf16.gmra.mxu0 %v607
      %v696 = vpop.f32.mrf.mxu0
      %v697 = vadd.f32 %v632, %v696
      %v698 = vpop.f32.mrf.mxu0
      %v699 = vadd.f32 %v632, %v698
      %700 = vmatmul.bf16.gmra.mxu0 %v608
      %v701 = vpop.f32.mrf.mxu0
      %v702 = vadd.f32 %v632, %v701
      %v703 = vpop.f32.mrf.mxu0
      %v704 = vadd.f32 %v632, %v703
      %705 = vmatmul.bf16.gmra.mxu0 %v609
      %v706 = vpop.f32.mrf.mxu0
      %v707 = vadd.f32 %v632, %v706
      %v708 = vpop.f32.mrf.mxu0
      %v709 = vadd.f32 %v632, %v708
      %710 = vmatmul.bf16.gmra.mxu0 %v610
      %v711 = vpop.f32.mrf.mxu0
      %v712 = vadd.f32 %v632, %v711
      %v713 = vpop.f32.mrf.mxu0
      %v714 = vadd.f32 %v632, %v713
      %715 = vmatmul.bf16.gmra.mxu0 %v611
      %v716 = vpop.f32.mrf.mxu0
      %v717 = vadd.f32 %v632, %v716
      %v718 = vpop.f32.mrf.mxu0
      %v719 = vadd.f32 %v632, %v718
      %720 = vmatmul.bf16.gmra.mxu0 %v612
      %v721 = vpop.f32.mrf.mxu0
      %v722 = vadd.f32 %v632, %v721
      %v723 = vpop.f32.mrf.mxu0
      %v724 = vadd.f32 %v632, %v723
      %725 = vmatmul.bf16.gmra.mxu0 %v613
      %v726 = vpop.f32.mrf.mxu0
      %v727 = vadd.f32 %v632, %v726
      %v728 = vpop.f32.mrf.mxu0
      %v729 = vadd.f32 %v632, %v728
      %730 = vdwg.mxu0
      %v731 = vmax.f32 %v692, 0.0
      %v732 = vmax.f32 %v694, 0.0
      %v733 = vmax.f32 %v697, 0.0
      %v734 = vmax.f32 %v699, 0.0
      %v735 = vmax.f32 %v702, 0.0
      %v736 = vmax.f32 %v704, 0.0
      %v737 = vmax.f32 %v707, 0.0
      %v738 = vmax.f32 %v709, 0.0
      %v739 = vmax.f32 %v712, 0.0
      %v740 = vmax.f32 %v714, 0.0
      %v741 = vmax.f32 %v717, 0.0
      %v742 = vmax.f32 %v719, 0.0
      %v743 = vmax.f32 %v722, 0.0
      %v744 = vmax.f32 %v724, 0.0
      %v745 = vmax.f32 %v727, 0.0
      %v746 = vmax.f32 %v729, 0.0
      %747 = vst [vmem:[%s280] sm:$0xff] %v731
      %748 = vst [vmem:[%s280 + $0x8] sm:$0xff] %v732
      %749 = vst [vmem:[%s280 + $0x10] sm:$0xff] %v733
      %750 = vst [vmem:[%s280 + $0x18] sm:$0xff] %v734
      %751 = vst [vmem:[%s280 + $0x20] sm:$0xff] %v735
      %752 = vst [vmem:[%s280 + $0x28] sm:$0xff] %v736
      %753 = vst [vmem:[%s280 + $0x30] sm:$0xff] %v737
      %754 = vst [vmem:[%s280 + $0x38] sm:$0xff] %v738
      %755 = vst [vmem:[%s280 + $0x40] sm:$0xff] %v739
      %756 = vst [vmem:[%s280 + $0x48] sm:$0xff] %v740
      %757 = vst [vmem:[%s280 + $0x50] sm:$0xff] %v741
      %758 = vst [vmem:[%s280 + $0x58] sm:$0xff] %v742
      %759 = vst [vmem:[%s280 + $0x60] sm:$0xff] %v743
      %760 = vst [vmem:[%s280 + $0x68] sm:$0xff] %v744
      %761 = vst [vmem:[%s280 + $0x70] sm:$0xff] %v745
      %762 = vst [vmem:[%s280 + $0x78] sm:$0xff] %v746
      %s763 = smul.u32 16, %s18
      %p764 = scmp.lt.s32.totalorder %s763, 31
      %s765 = scalar_select %p764, %s763, 31
      %s766 = smul.addr %s765, 8
      %s767 = scalar_lea.vmem %s7, %s766
      // Predicated region
      $region49: #{bootstraps_encoder_forward.1} parent=47 // pred_check
        %p768 = pneg %p188
      $region50: #{bootstraps_encoder_forward.1} parent=47 // pred_check_branch
        %770 = sbr.rel (%p768) target = $region52
      $region51: #{bootstraps_encoder_forward.1} parent=47 // pred_region
        %s771 = smul.u32 16, %s18
      $region52: #{bootstraps_encoder_forward.1} parent=47 // pred_fallthru
        _
    $region48: #{bootstraps_encoder_forward.1} parent=5 // pred_fallthru
      _
    %p772 = scmp.le.s32.totalorder 2, %s13
    // Predicated region
    $region53: #{bootstraps_encoder_forward.1} parent=5 // pred_check
      %p773 = pneg %p772
    $region54: #{bootstraps_encoder_forward.1} parent=5 // pred_check_branch
      %775 = sbr.rel (%p773) target = $region56
    $region55: #{bootstraps_encoder_forward.1} parent=5 // pred_region
      %s776 = ssub.s32 %s13, 2
      // Predicated region
      $region57: #{bootstraps_encoder_forward.1} parent=55 // pred_check
        %p777 = pneg %p194
      $region58: #{bootstraps_encoder_forward.1} parent=55 // pred_check_branch
        %779 = sbr.rel (%p777) target = $region60
      $region59: #{bootstraps_encoder_forward.1} parent=55 // pred_region
        %s780 = smul.u32 16, %s19
        %p781 = scmp.lt.s32.totalorder %s780, 31
        %s782 = scalar_select %p781, %s780, 31
        %s783 = smul.addr %s782, 8
        %s784 = scalar_lea.vmem %s7, %s783
      $region60: #{bootstraps_encoder_forward.1} parent=55 // pred_fallthru
        _
    $region56: #{bootstraps_encoder_forward.1} parent=5 // pred_fallthru
      _
  $region6: #{bootstraps_encoder_forward.1} parent=0 // loop_footer
    %s17 = sadd.s32 1, %s13
  $region7: #{bootstraps_encoder_forward.1} parent=0 // loop_footer_branch
    %12 = sbr.rel target = $region3
  $region8: #{bootstraps_encoder_forward.1} parent=0 // loop_exit
    _

</llo_original>
